<compile_context>
chip_gen: v7x
topology: tpu7x:2x2x1
jax: 0.10.0
libtpu: 0.0.40
codegen_flags: <defaults>
</compile_context>

<pallas_src>
import functools

import jax
import jax.numpy as jnp
from jax.experimental import pallas as pl
from jax.experimental.pallas import tpu as pltpu

# ---- model hyper-parameters (match the nn.Module defaults) ----
INPUT_DIM = 2
TIME_DIM = 1
HIDDEN_DIM = 128
NUM_LAYERS = 4
NUM_HIDDEN = NUM_LAYERS - 2          # number of Linear(H,H)+Swish layers
IN_FEATS = INPUT_DIM + TIME_DIM      # 3
LANES = 128
SUBLANES = 8
# TODO(synk): nn.Dropout / nn.BatchNorm1d branches are not implemented; they are
# inactive under the module defaults (dropout_rate=0.0, use_batch_norm=False).


def _round_up(x, m):
    return (x + m - 1) // m * m


def _swish_ref(z):
    return z * jax.nn.sigmoid(z)


def _supports_bf16_elementwise():
    """bf16 VPU/EUP exists on v6e/v7x; v5e (and unknown chips) keep f32."""
    try:
        kind = jax.devices()[0].device_kind.lower()
    except Exception:
        return False
    return ("v6" in kind) or ("v7" in kind)


def mlp_kernel(x_ref, t_ref, w_in_ref, b_in_ref, w_h_ref, b_h_ref,
               w_out_ref, b_out_ref, o_ref, *, elem_dtype):
    """Fused MLP forward for one tile of rows, feature-major layout.

    Features live on sublanes, rows live on the 128-lane axis.

    x_ref    : (INPUT_DIM, TM)        f32
    t_ref    : (1, TM)                f32
    w_in_ref : (H, IN_FEATS)          f32   input weight^T (VPU path, K=3)
    b_in_ref : (H, 1)                 f32
    w_h_ref  : (NUM_HIDDEN, H, H)     bf16  hidden weights^T (MXU)
    b_h_ref  : (NUM_HIDDEN, H, 1)     f32
    w_out_ref: (SUBLANES, H)          bf16  output weight^T, sublane-padded
    b_out_ref: (SUBLANES, 1)          f32
    o_ref    : (INPUT_DIM, TM)        f32
    """

    def swish(z):
        # sigmoid(z) = 0.5*(1 + tanh(0.5*z)): a single EUP push per element
        # (vs exp + reciprocal = 2). z*sigmoid(z) stays on the VPU.
        z = z.astype(elem_dtype)
        return (0.5 * z) * (1.0 + jnp.tanh(0.5 * z))

    x = x_ref[...]                       # (INPUT_DIM, TM)
    t = t_ref[...]                       # (1, TM)
    w_in = w_in_ref[...]                 # (H, IN_FEATS)

    # ---- input projection: K = 3 -> three VPU outer-product MACs (no MXU pad) ----
    z = b_in_ref[...] + w_in[:, INPUT_DIM:IN_FEATS] * t      # t column
    for c in range(INPUT_DIM):           # static unroll (INPUT_DIM = 2)
        z = z + w_in[:, c:c + 1] * x[c:c + 1, :]
    h = swish(z)                         # (H, TM)

    # ---- hidden Linear(H,H) + Swish layers: bf16 MXU matmul, f32 accumulate ----
    for l in range(NUM_HIDDEN):          # static unroll; weights indexed statically
        z = jnp.dot(w_h_ref[l], h.astype(jnp.bfloat16),
                    preferred_element_type=jnp.float32) + b_h_ref[l]
        h = swish(z)

    # ---- output projection: (8, H) @ (H, TM); only first INPUT_DIM rows kept ----
    out = jnp.dot(w_out_ref[...], h.astype(jnp.bfloat16),
                  preferred_element_type=jnp.float32) + b_out_ref[...]
    o_ref[...] = out[:INPUT_DIM, :].astype(o_ref.dtype)


def init_params(key):
    """Deterministic PyTorch-nn.Linear-style init (uniform +-1/sqrt(fan_in))."""
    def linear(key, fan_in, fan_out):
        k_w, k_b = jax.random.split(key)
        bound = 1.0 / float(fan_in) ** 0.5
        w = jax.random.uniform(k_w, (fan_in, fan_out), jnp.float32, -bound, bound)
        b = jax.random.uniform(k_b, (fan_out,), jnp.float32, -bound, bound)
        return w, b

    keys = jax.random.split(key, NUM_HIDDEN + 2)
    w_in, b_in = linear(keys[0], IN_FEATS, HIDDEN_DIM)
    w_hs, b_hs = [], []
    for i in range(NUM_HIDDEN):
        w, b = linear(keys[1 + i], HIDDEN_DIM, HIDDEN_DIM)
        w_hs.append(w)
        b_hs.append(b)
    w_out, b_out = linear(keys[-1], HIDDEN_DIM, INPUT_DIM)
    return dict(w_in=w_in, b_in=b_in,
                w_h=jnp.stack(w_hs), b_h=jnp.stack(b_hs),
                w_out=w_out, b_out=b_out)


@functools.partial(jax.jit, static_argnames=("tile_rows", "bf16_elementwise"))
def _mlp_forward(x, t, params, *, tile_rows, bf16_elementwise):
    sz = x.shape
    xf = x.reshape(-1, INPUT_DIM).astype(jnp.float32)
    n = xf.shape[0]
    tf = t.astype(jnp.float32).reshape(-1, 1)
    tf = jnp.broadcast_to(tf, (n, 1))           # torch .expand(x.shape[0], 1)

    # Feature-major layout: rows on lanes, features on sublanes (lane-dense blocks).
    x_t = xf.T                                  # (INPUT_DIM, n)
    t_t = tf.T                                  # (1, n)

    # Row tile: multiple of 128 lanes; aim for >= 4 grid steps so both v7x
    # TensorCores get work; capped at tile_rows. Rows are zero-padded to a tile
    # multiple (pad flows through tanh with finite args and is sliced off).
    tile = min(_round_up(tile_rows, LANES), _round_up(max(1, -(-n // 4)), LANES))
    tile = max(LANES, tile)
    n_pad = _round_up(n, tile)
    if n_pad != n:
        x_t = jnp.pad(x_t, ((0, 0), (0, n_pad - n)))
        t_t = jnp.pad(t_t, ((0, 0), (0, n_pad - n)))

    # Weights transposed once (y^T = W^T @ x^T); MXU operands bf16, biases f32.
    w_in_t = params["w_in"].T                                    # (H, 3) f32
    b_in_t = params["b_in"].reshape(HIDDEN_DIM, 1)
    w_h_t = jnp.transpose(params["w_h"], (0, 2, 1)).astype(jnp.bfloat16)
    b_h_t = params["b_h"].reshape(NUM_HIDDEN, HIDDEN_DIM, 1)
    w_out_t = jnp.pad(params["w_out"].T,
                      ((0, SUBLANES - INPUT_DIM), (0, 0))).astype(jnp.bfloat16)
    b_out_t = jnp.pad(params["b_out"].reshape(INPUT_DIM, 1),
                      ((0, SUBLANES - INPUT_DIM), (0, 0)))

    grid = (n_pad // tile,)

    flops = 2 * n_pad * (IN_FEATS * HIDDEN_DIM
                         + NUM_HIDDEN * HIDDEN_DIM * HIDDEN_DIM
                         + HIDDEN_DIM * INPUT_DIM)
    transcendentals = n_pad * (NUM_HIDDEN + 1) * HIDDEN_DIM
    weight_bytes = ((w_in_t.size + b_in_t.size + b_h_t.size + b_out_t.size) * 4
                    + (w_h_t.size + w_out_t.size) * 2)
    bytes_accessed = 4 * n_pad * (INPUT_DIM + TIME_DIM + INPUT_DIM) + weight_bytes

    kernel = functools.partial(
        mlp_kernel,
        elem_dtype=jnp.bfloat16 if bf16_elementwise else jnp.float32)

    out_t = pl.pallas_call(
        kernel,
        out_shape=jax.ShapeDtypeStruct((INPUT_DIM, n_pad), jnp.float32),
        grid_spec=pltpu.PrefetchScalarGridSpec(
            num_scalar_prefetch=0,
            grid=grid,
            in_specs=[
                pl.BlockSpec((INPUT_DIM, tile), lambda i: (0, i)),              # x^T
                pl.BlockSpec((1, tile), lambda i: (0, i)),                      # t^T
                pl.BlockSpec((HIDDEN_DIM, IN_FEATS), lambda i: (0, 0)),         # w_in^T
                pl.BlockSpec((HIDDEN_DIM, 1), lambda i: (0, 0)),                # b_in
                pl.BlockSpec((NUM_HIDDEN, HIDDEN_DIM, HIDDEN_DIM),
                             lambda i: (0, 0, 0)),                              # w_h^T
                pl.BlockSpec((NUM_HIDDEN, HIDDEN_DIM, 1), lambda i: (0, 0, 0)), # b_h
                pl.BlockSpec((SUBLANES, HIDDEN_DIM), lambda i: (0, 0)),         # w_out^T
                pl.BlockSpec((SUBLANES, 1), lambda i: (0, 0)),                  # b_out
            ],
            out_specs=pl.BlockSpec((INPUT_DIM, tile), lambda i: (0, i)),
        ),
        compiler_params=pltpu.CompilerParams(
            dimension_semantics=("parallel",),      # row-tiles shard over TCs (v7x)
            vmem_limit_bytes=32 * 1024 * 1024,
        ),
        cost_estimate=pl.CostEstimate(
            flops=flops,
            transcendentals=transcendentals,
            bytes_accessed=bytes_accessed),
    )(x_t, t_t, w_in_t, b_in_t, w_h_t, b_h_t, w_out_t, b_out_t)

    return out_t[:, :n].T.reshape(sz)


def mlp_forward(x, t, params, *, tile_rows=2048, bf16_elementwise=None):
    """Pallas implementation of MLP.forward(x, t)."""
    if bf16_elementwise is None:
        bf16_elementwise = _supports_bf16_elementwise()
    return _mlp_forward(x, t, params, tile_rows=int(tile_rows),
                        bf16_elementwise=bool(bf16_elementwise))


def mlp_reference(x, t, params):
    """Pure-JAX f32 reference of the PyTorch forward (correctness check)."""
    sz = x.shape
    xf = x.reshape(-1, INPUT_DIM).astype(jnp.float32)
    n = xf.shape[0]
    tf = t.astype(jnp.float32).reshape(-1, TIME_DIM)
    tf = jnp.broadcast_to(tf.reshape(-1, 1), (n, 1))
    h = jnp.concatenate([xf, tf], axis=1)
    h = _swish_ref(h @ params["w_in"] + params["b_in"])
    for l in range(NUM_HIDDEN):
        h = _swish_ref(h @ params["w_h"][l] + params["b_h"][l])
    out = h @ params["w_out"] + params["b_out"]
    return out.reshape(sz)


if __name__ == "__main__":
    key = jax.random.PRNGKey(0)
    k_p, k_x, k_t, k_x2, k_t2 = jax.random.split(key, 5)

    params = init_params(k_p)

    # Small-shape check: x (2, 32, 2), t (2, 32, 1) -> 64 flattened rows.
    x = jax.random.normal(k_x, (2, 32, INPUT_DIM), dtype=jnp.float32)
    t = jax.random.uniform(k_t, (2, 32, TIME_DIM), dtype=jnp.float32)
    out = jax.block_until_ready(mlp_forward(x, t, params))
    ref = mlp_reference(x, t, params)
    assert out.shape == x.shape
    # Tolerance covers bf16 MXU operands + (v6e/v7x) bf16 elementwise Swish.
    assert jnp.allclose(out, ref, atol=5e-2, rtol=5e-2), "mismatch vs reference"

    # Multi-tile + row-padding path: 300 rows with 128-row tiles -> grid of 3.
    x2 = jax.random.normal(k_x2, (300, INPUT_DIM), dtype=jnp.float32)
    t2 = jax.random.uniform(k_t2, (300, TIME_DIM), dtype=jnp.float32)
    out2 = jax.block_until_ready(mlp_forward(x2, t2, params, tile_rows=128))
    ref2 = mlp_reference(x2, t2, params)
    assert out2.shape == x2.shape
    assert jnp.allclose(out2, ref2, atol=5e-2, rtol=5e-2), "mismatch (tiled path)"

    print("KERNEL_OK")
</pallas_src>

<mosaic_0001>
module attributes {stable_mosaic.version = 11 : i64} {
  func.func @mlp_kernel(%arg0: i32, %arg1: memref<2x128xf32, #tpu.memory_space<vmem>>, %arg2: memref<1x128xf32, #tpu.memory_space<vmem>>, %arg3: memref<128x3xf32, #tpu.memory_space<vmem>>, %arg4: memref<128x1xf32, #tpu.memory_space<vmem>>, %arg5: memref<2x128x128xbf16, #tpu.memory_space<vmem>>, %arg6: memref<2x128x1xf32, #tpu.memory_space<vmem>>, %arg7: memref<8x128xbf16, #tpu.memory_space<vmem>>, %arg8: memref<8x1xf32, #tpu.memory_space<vmem>>, %arg9: memref<2x128xf32, #tpu.memory_space<vmem>>) attributes {dimension_semantics = [#tpu.dimension_semantics<parallel>], iteration_bounds = array<i64: 1>, scalar_prefetch = 0 : i64, scratch_operands = 0 : i64, tpu.core_type = #tpu.core_type<tc>, window_params = [{transform_indices = @transform_0, window_bounds = array<i64: 2, 128>}, {transform_indices = @transform_1, window_bounds = array<i64: 1, 128>}, {pipeline_mode = #tpu.pipeline_mode<synchronous>, transform_indices = @transform_2, window_bounds = array<i64: 128, 3>}, {pipeline_mode = #tpu.pipeline_mode<synchronous>, transform_indices = @transform_3, window_bounds = array<i64: 128, 1>}, {pipeline_mode = #tpu.pipeline_mode<synchronous>, transform_indices = @transform_4, window_bounds = array<i64: 2, 128, 128>}, {pipeline_mode = #tpu.pipeline_mode<synchronous>, transform_indices = @transform_5, window_bounds = array<i64: 2, 128, 1>}, {pipeline_mode = #tpu.pipeline_mode<synchronous>, transform_indices = @transform_6, window_bounds = array<i64: 8, 128>}, {pipeline_mode = #tpu.pipeline_mode<synchronous>, transform_indices = @transform_7, window_bounds = array<i64: 8, 1>}, {transform_indices = @transform_8, window_bounds = array<i64: 2, 128>}]} {
    %c0 = arith.constant 0 : index
    %c0_0 = arith.constant 0 : index
    %0 = vector.load %arg1[%c0, %c0_0] : memref<2x128xf32, #tpu.memory_space<vmem>>, vector<2x128xf32>
    %c0_1 = arith.constant 0 : index
    %c0_2 = arith.constant 0 : index
    %1 = vector.load %arg2[%c0_1, %c0_2] : memref<1x128xf32, #tpu.memory_space<vmem>>, vector<1x128xf32>
    %c0_3 = arith.constant 0 : index
    %c0_4 = arith.constant 0 : index
    %2 = vector.load %arg3[%c0_3, %c0_4] : memref<128x3xf32, #tpu.memory_space<vmem>>, vector<128x3xf32>
    %c0_5 = arith.constant 0 : index
    %c0_6 = arith.constant 0 : index
    %3 = vector.load %arg4[%c0_5, %c0_6] : memref<128x1xf32, #tpu.memory_space<vmem>>, vector<128x1xf32>
    %4 = vector.extract_strided_slice %2 {offsets = [0, 2], sizes = [128, 1], strides = [1, 1]} : vector<128x3xf32> to vector<128x1xf32>
    %5 = vector.broadcast %4 : vector<128x1xf32> to vector<128x128xf32>
    %6 = vector.broadcast %1 : vector<1x128xf32> to vector<128x128xf32>
    %7 = arith.mulf %5, %6 : vector<128x128xf32>
    %8 = vector.broadcast %3 : vector<128x1xf32> to vector<128x128xf32>
    %9 = arith.addf %8, %7 : vector<128x128xf32>
    %10 = vector.extract_strided_slice %2 {offsets = [0, 0], sizes = [128, 1], strides = [1, 1]} : vector<128x3xf32> to vector<128x1xf32>
    %11 = vector.extract_strided_slice %0 {offsets = [0, 0], sizes = [1, 128], strides = [1, 1]} : vector<2x128xf32> to vector<1x128xf32>
    %12 = vector.broadcast %10 : vector<128x1xf32> to vector<128x128xf32>
    %13 = vector.broadcast %11 : vector<1x128xf32> to vector<128x128xf32>
    %14 = arith.mulf %12, %13 : vector<128x128xf32>
    %15 = arith.addf %9, %14 : vector<128x128xf32>
    %16 = vector.extract_strided_slice %2 {offsets = [0, 1], sizes = [128, 1], strides = [1, 1]} : vector<128x3xf32> to vector<128x1xf32>
    %17 = vector.extract_strided_slice %0 {offsets = [1, 0], sizes = [1, 128], strides = [1, 1]} : vector<2x128xf32> to vector<1x128xf32>
    %18 = vector.broadcast %16 : vector<128x1xf32> to vector<128x128xf32>
    %19 = vector.broadcast %17 : vector<1x128xf32> to vector<128x128xf32>
    %20 = arith.mulf %18, %19 : vector<128x128xf32>
    %21 = arith.addf %15, %20 : vector<128x128xf32>
    %cst = arith.constant 5.000000e-01 : f32
    %22 = vector.broadcast %cst : f32 to vector<128x128xf32>
    %23 = arith.mulf %22, %21 : vector<128x128xf32>
    %cst_7 = arith.constant 5.000000e-01 : f32
    %24 = vector.broadcast %cst_7 : f32 to vector<128x128xf32>
    %25 = arith.mulf %24, %21 : vector<128x128xf32>
    %26 = math.tanh %25 : vector<128x128xf32>
    %cst_8 = arith.constant 1.000000e+00 : f32
    %27 = vector.broadcast %cst_8 : f32 to vector<128x128xf32>
    %28 = arith.addf %27, %26 : vector<128x128xf32>
    %29 = arith.mulf %23, %28 : vector<128x128xf32>
    %c0_9 = arith.constant 0 : index
    %c0_10 = arith.constant 0 : index
    %c0_11 = arith.constant 0 : index
    %30 = vector.load %arg5[%c0_9, %c0_10, %c0_11] : memref<2x128x128xbf16, #tpu.memory_space<vmem>>, vector<1x128x128xbf16>
    %31 = vector.shape_cast %30 : vector<1x128x128xbf16> to vector<128x128xbf16>
    %32 = arith.truncf %29 : vector<128x128xf32> to vector<128x128xbf16>
    %cst_12 = arith.constant dense<0.000000e+00> : vector<128x128xf32>
    %33 = tpu.matmul %31, %32, %cst_12 {dimension_numbers = #tpu.dot_dimension_numbers<[1], [0], [0], [1], [0, 0, 1, 1], [], []>} : vector<128x128xbf16>, vector<128x128xbf16>, vector<128x128xf32> -> vector<128x128xf32>
    %c0_13 = arith.constant 0 : index
    %c0_14 = arith.constant 0 : index
    %c0_15 = arith.constant 0 : index
    %34 = vector.load %arg6[%c0_13, %c0_14, %c0_15] : memref<2x128x1xf32, #tpu.memory_space<vmem>>, vector<1x128x1xf32>
    %35 = vector.shape_cast %34 : vector<1x128x1xf32> to vector<128x1xf32>
    %36 = vector.broadcast %35 : vector<128x1xf32> to vector<128x128xf32>
    %37 = arith.addf %33, %36 : vector<128x128xf32>
    %cst_16 = arith.constant 5.000000e-01 : f32
    %38 = vector.broadcast %cst_16 : f32 to vector<128x128xf32>
    %39 = arith.mulf %38, %37 : vector<128x128xf32>
    %cst_17 = arith.constant 5.000000e-01 : f32
    %40 = vector.broadcast %cst_17 : f32 to vector<128x128xf32>
    %41 = arith.mulf %40, %37 : vector<128x128xf32>
    %42 = math.tanh %41 : vector<128x128xf32>
    %cst_18 = arith.constant 1.000000e+00 : f32
    %43 = vector.broadcast %cst_18 : f32 to vector<128x128xf32>
    %44 = arith.addf %43, %42 : vector<128x128xf32>
    %45 = arith.mulf %39, %44 : vector<128x128xf32>
    %c1 = arith.constant 1 : index
    %c0_19 = arith.constant 0 : index
    %c0_20 = arith.constant 0 : index
    %46 = vector.load %arg5[%c1, %c0_19, %c0_20] : memref<2x128x128xbf16, #tpu.memory_space<vmem>>, vector<1x128x128xbf16>
    %47 = vector.shape_cast %46 : vector<1x128x128xbf16> to vector<128x128xbf16>
    %48 = arith.truncf %45 : vector<128x128xf32> to vector<128x128xbf16>
    %cst_21 = arith.constant dense<0.000000e+00> : vector<128x128xf32>
    %49 = tpu.matmul %47, %48, %cst_21 {dimension_numbers = #tpu.dot_dimension_numbers<[1], [0], [0], [1], [0, 0, 1, 1], [], []>} : vector<128x128xbf16>, vector<128x128xbf16>, vector<128x128xf32> -> vector<128x128xf32>
    %c1_22 = arith.constant 1 : index
    %c0_23 = arith.constant 0 : index
    %c0_24 = arith.constant 0 : index
    %50 = vector.load %arg6[%c1_22, %c0_23, %c0_24] : memref<2x128x1xf32, #tpu.memory_space<vmem>>, vector<1x128x1xf32>
    %51 = vector.shape_cast %50 : vector<1x128x1xf32> to vector<128x1xf32>
    %52 = vector.broadcast %51 : vector<128x1xf32> to vector<128x128xf32>
    %53 = arith.addf %49, %52 : vector<128x128xf32>
    %cst_25 = arith.constant 5.000000e-01 : f32
    %54 = vector.broadcast %cst_25 : f32 to vector<128x128xf32>
    %55 = arith.mulf %54, %53 : vector<128x128xf32>
    %cst_26 = arith.constant 5.000000e-01 : f32
    %56 = vector.broadcast %cst_26 : f32 to vector<128x128xf32>
    %57 = arith.mulf %56, %53 : vector<128x128xf32>
    %58 = math.tanh %57 : vector<128x128xf32>
    %cst_27 = arith.constant 1.000000e+00 : f32
    %59 = vector.broadcast %cst_27 : f32 to vector<128x128xf32>
    %60 = arith.addf %59, %58 : vector<128x128xf32>
    %61 = arith.mulf %55, %60 : vector<128x128xf32>
    %c0_28 = arith.constant 0 : index
    %c0_29 = arith.constant 0 : index
    %62 = vector.load %arg7[%c0_28, %c0_29] : memref<8x128xbf16, #tpu.memory_space<vmem>>, vector<8x128xbf16>
    %63 = arith.truncf %61 : vector<128x128xf32> to vector<128x128xbf16>
    %cst_30 = arith.constant dense<0.000000e+00> : vector<8x128xf32>
    %64 = tpu.matmul %62, %63, %cst_30 {dimension_numbers = #tpu.dot_dimension_numbers<[1], [0], [0], [1], [0, 0, 1, 1], [], []>} : vector<8x128xbf16>, vector<128x128xbf16>, vector<8x128xf32> -> vector<8x128xf32>
    %c0_31 = arith.constant 0 : index
    %c0_32 = arith.constant 0 : index
    %65 = vector.load %arg8[%c0_31, %c0_32] : memref<8x1xf32, #tpu.memory_space<vmem>>, vector<8x1xf32>
    %66 = vector.broadcast %65 : vector<8x1xf32> to vector<8x128xf32>
    %67 = arith.addf %64, %66 : vector<8x128xf32>
    %68 = vector.extract_strided_slice %67 {offsets = [0, 0], sizes = [2, 128], strides = [1, 1]} : vector<8x128xf32> to vector<2x128xf32>
    %c0_33 = arith.constant 0 : index
    %c0_34 = arith.constant 0 : index
    %69 = vector.load %arg9[%c0_33, %c0_34] : memref<2x128xf32, #tpu.memory_space<vmem>>, vector<2x128xf32>
    tpu.vector_store %arg9[%c0_33, %c0_34], %68 {strides = array<i32>} : memref<2x128xf32, #tpu.memory_space<vmem>>, vector<2x128xf32>,
    return
  }
  func.func @transform_0(%arg0: i32) -> (i32, i32) {
    %c0_i32 = arith.constant 0 : i32
    %c0_i32_0 = arith.constant 0 : i32
    return %c0_i32, %arg0 : i32, i32
  }
  func.func @transform_1(%arg0: i32) -> (i32, i32) {
    %c0_i32 = arith.constant 0 : i32
    %c0_i32_0 = arith.constant 0 : i32
    return %c0_i32, %arg0 : i32, i32
  }
  func.func @transform_2(%arg0: i32) -> (i32, i32) {
    %c0_i32 = arith.constant 0 : i32
    %c0_i32_0 = arith.constant 0 : i32
    %c0_i32_1 = arith.constant 0 : i32
    return %c0_i32, %c0_i32_0 : i32, i32
  }
  func.func @transform_3(%arg0: i32) -> (i32, i32) {
    %c0_i32 = arith.constant 0 : i32
    %c0_i32_0 = arith.constant 0 : i32
    %c0_i32_1 = arith.constant 0 : i32
    return %c0_i32, %c0_i32_0 : i32, i32
  }
  func.func @transform_4(%arg0: i32) -> (i32, i32, i32) {
    %c0_i32 = arith.constant 0 : i32
    %c0_i32_0 = arith.constant 0 : i32
    %c0_i32_1 = arith.constant 0 : i32
    %c0_i32_2 = arith.constant 0 : i32
    return %c0_i32, %c0_i32_0, %c0_i32_1 : i32, i32, i32
  }
  func.func @transform_5(%arg0: i32) -> (i32, i32, i32) {
    %c0_i32 = arith.constant 0 : i32
    %c0_i32_0 = arith.constant 0 : i32
    %c0_i32_1 = arith.constant 0 : i32
    %c0_i32_2 = arith.constant 0 : i32
    return %c0_i32, %c0_i32_0, %c0_i32_1 : i32, i32, i32
  }
  func.func @transform_6(%arg0: i32) -> (i32, i32) {
    %c0_i32 = arith.constant 0 : i32
    %c0_i32_0 = arith.constant 0 : i32
    %c0_i32_1 = arith.constant 0 : i32
    return %c0_i32, %c0_i32_0 : i32, i32
  }
  func.func @transform_7(%arg0: i32) -> (i32, i32) {
    %c0_i32 = arith.constant 0 : i32
    %c0_i32_0 = arith.constant 0 : i32
    %c0_i32_1 = arith.constant 0 : i32
    return %c0_i32, %c0_i32_0 : i32, i32
  }
  func.func @transform_8(%arg0: i32) -> (i32, i32) {
    %c0_i32 = arith.constant 0 : i32
    %c0_i32_0 = arith.constant 0 : i32
    return %c0_i32, %arg0 : i32, i32
  }
}

</mosaic_0001>

<llo_original>
// kernel: _mlp_forward.1
$region0: #{_mlp_forward.1}
  #allocation0 [shape = 'u32[]', space=smem, size = 0x4, offset = 0x4, fixed_abs, tag = 'smem constant byte address 0x4 - core index']
  #allocation1 [shape = 'u32[144,128]{1,0:T(1,128)}', space=vmem, size = 0x12000, scoped, tag = 'internal scratch']
  %s0 = inlined_call_operand.vmem [shape: f32[2,128], index: 0, kind: input, shape index: {}]
  %s1 = inlined_call_operand.vmem [shape: f32[1,128], index: 1, kind: input, shape index: {}]
  %s2 = inlined_call_operand.vmem [shape: f32[128,3], index: 2, kind: input, shape index: {}]
  %s3 = inlined_call_operand.vmem [shape: f32[128,1], index: 3, kind: input, shape index: {}]
  %s4 = inlined_call_operand.vmem [shape: bf16[2,128,128], index: 4, kind: input, shape index: {}]
  %s5 = inlined_call_operand.vmem [shape: f32[2,128,1], index: 5, kind: input, shape index: {}]
  %s6 = inlined_call_operand.vmem [shape: bf16[8,128], index: 6, kind: input, shape index: {}]
  %s7 = inlined_call_operand.vmem [shape: f32[8,1], index: 7, kind: input, shape index: {}]
  %s8 = inlined_call_operand.vmem [shape: f32[2,128], index: 8, kind: output, shape index: {}]
  %s9 = sld [smem:[#allocation0]]
  $region42: #{_mlp_forward.1} parent=0
    _
  %s11 = ssub.s32 1, %s9
  %s12 = scalar_select 0, %s11, %s9
  // Predicated region
  $region2: #{_mlp_forward.1} parent=0 // pred_check
    _
  $region3: #{_mlp_forward.1} parent=0 // pred_check_branch
    %14 = sbr.rel (0) target = $region5
  $region4: #{_mlp_forward.1} parent=0 // pred_region
    _
  $region5: #{_mlp_forward.1} parent=0 // pred_fallthru
    _
  // Predicated region
  $region6: #{_mlp_forward.1} parent=0 // pred_check
    _
  $region7: #{_mlp_forward.1} parent=0 // pred_check_branch
    %16 = sbr.rel (0) target = $region9
  $region8: #{_mlp_forward.1} parent=0 // pred_region
    _
  $region9: #{_mlp_forward.1} parent=0 // pred_fallthru
    _
  // Predicated region
  $region10: #{_mlp_forward.1} parent=0 // pred_check
    _
  $region11: #{_mlp_forward.1} parent=0 // pred_check_branch
    %18 = sbr.rel (0) target = $region13
  $region12: #{_mlp_forward.1} parent=0 // pred_region
    _
  $region13: #{_mlp_forward.1} parent=0 // pred_fallthru
    _
  // Predicated region
  $region14: #{_mlp_forward.1} parent=0 // pred_check
    _
  $region15: #{_mlp_forward.1} parent=0 // pred_check_branch
    %20 = sbr.rel (0) target = $region17
  $region16: #{_mlp_forward.1} parent=0 // pred_region
    _
  $region17: #{_mlp_forward.1} parent=0 // pred_fallthru
    _
  // Predicated region
  $region18: #{_mlp_forward.1} parent=0 // pred_check
    _
  $region19: #{_mlp_forward.1} parent=0 // pred_check_branch
    %22 = sbr.rel (0) target = $region21
  $region20: #{_mlp_forward.1} parent=0 // pred_region
    _
  $region21: #{_mlp_forward.1} parent=0 // pred_fallthru
    _
  // Predicated region
  $region22: #{_mlp_forward.1} parent=0 // pred_check
    _
  $region23: #{_mlp_forward.1} parent=0 // pred_check_branch
    %24 = sbr.rel (0) target = $region25
  $region24: #{_mlp_forward.1} parent=0 // pred_region
    _
  $region25: #{_mlp_forward.1} parent=0 // pred_fallthru
    _
  // Predicated region
  $region26: #{_mlp_forward.1} parent=0 // pred_check
    _
  $region27: #{_mlp_forward.1} parent=0 // pred_check_branch
    %26 = sbr.rel (0) target = $region29
  $region28: #{_mlp_forward.1} parent=0 // pred_region
    _
  $region29: #{_mlp_forward.1} parent=0 // pred_fallthru
    _
  // Predicated region
  $region30: #{_mlp_forward.1} parent=0 // pred_check
    _
  $region31: #{_mlp_forward.1} parent=0 // pred_check_branch
    %28 = sbr.rel (0) target = $region33
  $region32: #{_mlp_forward.1} parent=0 // pred_region
    _
  $region33: #{_mlp_forward.1} parent=0 // pred_fallthru
    _
  %v30 = vld [vmem:[%s0] sm:$0x3]
  %v31 = vld [vmem:[%s1] sm:$0x1]
  %v32 = vld [vmem:[%s2] sm:$0xff]
  %v33 = vld [vmem:[%s2 + $0x8] sm:$0xff]
  %v34 = vld [vmem:[%s2 + $0x10] sm:$0xff]
  %v35 = vld [vmem:[%s2 + $0x18] sm:$0xff]
  %v36 = vld [vmem:[%s2 + $0x20] sm:$0xff]
  %v37 = vld [vmem:[%s2 + $0x28] sm:$0xff]
  %v38 = vld [vmem:[%s2 + $0x30] sm:$0xff]
  %v39 = vld [vmem:[%s2 + $0x38] sm:$0xff]
  %v40 = vld [vmem:[%s2 + $0x40] sm:$0xff]
  %v41 = vld [vmem:[%s2 + $0x48] sm:$0xff]
  %v42 = vld [vmem:[%s2 + $0x50] sm:$0xff]
  %v43 = vld [vmem:[%s2 + $0x58] sm:$0xff]
  %v44 = vld [vmem:[%s2 + $0x60] sm:$0xff]
  %v45 = vld [vmem:[%s2 + $0x68] sm:$0xff]
  %v46 = vld [vmem:[%s2 + $0x70] sm:$0xff]
  %v47 = vld [vmem:[%s2 + $0x78] sm:$0xff]
  %v48 = vld [vmem:[%s3] sm:$0xff]
  %v49 = vld [vmem:[%s3 + $0x8] sm:$0xff]
  %v50 = vld [vmem:[%s3 + $0x10] sm:$0xff]
  %v51 = vld [vmem:[%s3 + $0x18] sm:$0xff]
  %v52 = vld [vmem:[%s3 + $0x20] sm:$0xff]
  %v53 = vld [vmem:[%s3 + $0x28] sm:$0xff]
  %v54 = vld [vmem:[%s3 + $0x30] sm:$0xff]
  %v55 = vld [vmem:[%s3 + $0x38] sm:$0xff]
  %v56 = vld [vmem:[%s3 + $0x40] sm:$0xff]
  %v57 = vld [vmem:[%s3 + $0x48] sm:$0xff]
  %v58 = vld [vmem:[%s3 + $0x50] sm:$0xff]
  %v59 = vld [vmem:[%s3 + $0x58] sm:$0xff]
  %v60 = vld [vmem:[%s3 + $0x60] sm:$0xff]
  %v61 = vld [vmem:[%s3 + $0x68] sm:$0xff]
  %v62 = vld [vmem:[%s3 + $0x70] sm:$0xff]
  %v63 = vld [vmem:[%s3 + $0x78] sm:$0xff]
  %65 = vset.pattern.permute.xlu0 2
  %66 = vperm.xlu0 %65, %v32
  %v67 = vpop.permute.xlu0 %66
  %70 = vset.pattern.permute.xlu0 2
  %71 = vperm.xlu0 %70, %v33
  %v72 = vpop.permute.xlu0 %71
  %75 = vset.pattern.permute.xlu0 2
  %76 = vperm.xlu0 %75, %v34
  %v77 = vpop.permute.xlu0 %76
  %80 = vset.pattern.permute.xlu0 2
  %81 = vperm.xlu0 %80, %v35
  %v82 = vpop.permute.xlu0 %81
  %85 = vset.pattern.permute.xlu0 2
  %86 = vperm.xlu0 %85, %v36
  %v87 = vpop.permute.xlu0 %86
  %90 = vset.pattern.permute.xlu0 2
  %91 = vperm.xlu0 %90, %v37
  %v92 = vpop.permute.xlu0 %91
  %95 = vset.pattern.permute.xlu0 2
  %96 = vperm.xlu0 %95, %v38
  %v97 = vpop.permute.xlu0 %96
  %100 = vset.pattern.permute.xlu0 2
  %101 = vperm.xlu0 %100, %v39
  %v102 = vpop.permute.xlu0 %101
  %105 = vset.pattern.permute.xlu0 2
  %106 = vperm.xlu0 %105, %v40
  %v107 = vpop.permute.xlu0 %106
  %110 = vset.pattern.permute.xlu0 2
  %111 = vperm.xlu0 %110, %v41
  %v112 = vpop.permute.xlu0 %111
  %115 = vset.pattern.permute.xlu0 2
  %116 = vperm.xlu0 %115, %v42
  %v117 = vpop.permute.xlu0 %116
  %120 = vset.pattern.permute.xlu0 2
  %121 = vperm.xlu0 %120, %v43
  %v122 = vpop.permute.xlu0 %121
  %125 = vset.pattern.permute.xlu0 2
  %126 = vperm.xlu0 %125, %v44
  %v127 = vpop.permute.xlu0 %126
  %130 = vset.pattern.permute.xlu0 2
  %131 = vperm.xlu0 %130, %v45
  %v132 = vpop.permute.xlu0 %131
  %135 = vset.pattern.permute.xlu0 2
  %136 = vperm.xlu0 %135, %v46
  %v137 = vpop.permute.xlu0 %136
  %140 = vset.pattern.permute.xlu0 2
  %141 = vperm.xlu0 %140, %v47
  %v142 = vpop.permute.xlu0 %141
  %v145 = vlaneseq
  %v146 = vshrl.u32 %v145, 7
  %v147 = vsub.s32 0, %v146
  %v148 = vrot.slane %v31, %v147
  %v150 = vmul.f32 %v67, %v148
  %v151 = vmul.f32 %v72, %v148
  %v152 = vmul.f32 %v77, %v148
  %v153 = vmul.f32 %v82, %v148
  %v154 = vmul.f32 %v87, %v148
  %v155 = vmul.f32 %v92, %v148
  %v156 = vmul.f32 %v97, %v148
  %v157 = vmul.f32 %v102, %v148
  %v158 = vmul.f32 %v107, %v148
  %v159 = vmul.f32 %v112, %v148
  %v160 = vmul.f32 %v117, %v148
  %v161 = vmul.f32 %v122, %v148
  %v162 = vmul.f32 %v127, %v148
  %v163 = vmul.f32 %v132, %v148
  %v164 = vmul.f32 %v137, %v148
  %v165 = vmul.f32 %v142, %v148
  %167 = vset.pattern.permute.xlu0 0
  %168 = vperm.xlu0 %167, %v48
  %v169 = vpop.permute.xlu0 %168
  %172 = vset.pattern.permute.xlu0 0
  %173 = vperm.xlu0 %172, %v49
  %v174 = vpop.permute.xlu0 %173
  %177 = vset.pattern.permute.xlu0 0
  %178 = vperm.xlu0 %177, %v50
  %v179 = vpop.permute.xlu0 %178
  %182 = vset.pattern.permute.xlu0 0
  %183 = vperm.xlu0 %182, %v51
  %v184 = vpop.permute.xlu0 %183
  %187 = vset.pattern.permute.xlu0 0
  %188 = vperm.xlu0 %187, %v52
  %v189 = vpop.permute.xlu0 %188
  %192 = vset.pattern.permute.xlu0 0
  %193 = vperm.xlu0 %192, %v53
  %v194 = vpop.permute.xlu0 %193
  %197 = vset.pattern.permute.xlu0 0
  %198 = vperm.xlu0 %197, %v54
  %v199 = vpop.permute.xlu0 %198
  %202 = vset.pattern.permute.xlu0 0
  %203 = vperm.xlu0 %202, %v55
  %v204 = vpop.permute.xlu0 %203
  %207 = vset.pattern.permute.xlu0 0
  %208 = vperm.xlu0 %207, %v56
  %v209 = vpop.permute.xlu0 %208
  %212 = vset.pattern.permute.xlu0 0
  %213 = vperm.xlu0 %212, %v57
  %v214 = vpop.permute.xlu0 %213
  %217 = vset.pattern.permute.xlu0 0
  %218 = vperm.xlu0 %217, %v58
  %v219 = vpop.permute.xlu0 %218
  %222 = vset.pattern.permute.xlu0 0
  %223 = vperm.xlu0 %222, %v59
  %v224 = vpop.permute.xlu0 %223
  %227 = vset.pattern.permute.xlu0 0
  %228 = vperm.xlu0 %227, %v60
  %v229 = vpop.permute.xlu0 %228
  %232 = vset.pattern.permute.xlu0 0
  %233 = vperm.xlu0 %232, %v61
  %v234 = vpop.permute.xlu0 %233
  %237 = vset.pattern.permute.xlu0 0
  %238 = vperm.xlu0 %237, %v62
  %v239 = vpop.permute.xlu0 %238
  %242 = vset.pattern.permute.xlu0 0
  %243 = vperm.xlu0 %242, %v63
  %v244 = vpop.permute.xlu0 %243
  %v246 = vadd.f32 %v169, %v150
  %v247 = vadd.f32 %v174, %v151
  %v248 = vadd.f32 %v179, %v152
  %v249 = vadd.f32 %v184, %v153
  %v250 = vadd.f32 %v189, %v154
  %v251 = vadd.f32 %v194, %v155
  %v252 = vadd.f32 %v199, %v156
  %v253 = vadd.f32 %v204, %v157
  %v254 = vadd.f32 %v209, %v158
  %v255 = vadd.f32 %v214, %v159
  %v256 = vadd.f32 %v219, %v160
  %v257 = vadd.f32 %v224, %v161
  %v258 = vadd.f32 %v229, %v162
  %v259 = vadd.f32 %v234, %v163
  %v260 = vadd.f32 %v239, %v164
  %v261 = vadd.f32 %v244, %v165
  %262 = vset.pattern.permute.xlu0 0
  %263 = vperm.xlu0 %262, %v32
  %v264 = vpop.permute.xlu0 %263
  %266 = vset.pattern.permute.xlu0 0
  %267 = vperm.xlu0 %266, %v33
  %v268 = vpop.permute.xlu0 %267
  %270 = vset.pattern.permute.xlu0 0
  %271 = vperm.xlu0 %270, %v34
  %v272 = vpop.permute.xlu0 %271
  %274 = vset.pattern.permute.xlu0 0
  %275 = vperm.xlu0 %274, %v35
  %v276 = vpop.permute.xlu0 %275
  %278 = vset.pattern.permute.xlu0 0
  %279 = vperm.xlu0 %278, %v36
  %v280 = vpop.permute.xlu0 %279
  %282 = vset.pattern.permute.xlu0 0
  %283 = vperm.xlu0 %282, %v37
  %v284 = vpop.permute.xlu0 %283
  %286 = vset.pattern.permute.xlu0 0
  %287 = vperm.xlu0 %286, %v38
  %v288 = vpop.permute.xlu0 %287
  %290 = vset.pattern.permute.xlu0 0
  %291 = vperm.xlu0 %290, %v39
  %v292 = vpop.permute.xlu0 %291
  %294 = vset.pattern.permute.xlu0 0
  %295 = vperm.xlu0 %294, %v40
  %v296 = vpop.permute.xlu0 %295
  %298 = vset.pattern.permute.xlu0 0
  %299 = vperm.xlu0 %298, %v41
  %v300 = vpop.permute.xlu0 %299
  %302 = vset.pattern.permute.xlu0 0
  %303 = vperm.xlu0 %302, %v42
  %v304 = vpop.permute.xlu0 %303
  %306 = vset.pattern.permute.xlu0 0
  %307 = vperm.xlu0 %306, %v43
  %v308 = vpop.permute.xlu0 %307
  %310 = vset.pattern.permute.xlu0 0
  %311 = vperm.xlu0 %310, %v44
  %v312 = vpop.permute.xlu0 %311
  %314 = vset.pattern.permute.xlu0 0
  %315 = vperm.xlu0 %314, %v45
  %v316 = vpop.permute.xlu0 %315
  %318 = vset.pattern.permute.xlu0 0
  %319 = vperm.xlu0 %318, %v46
  %v320 = vpop.permute.xlu0 %319
  %322 = vset.pattern.permute.xlu0 0
  %323 = vperm.xlu0 %322, %v47
  %v324 = vpop.permute.xlu0 %323
  %v326 = vlaneseq
  %v327 = vshrl.u32 %v326, 7
  %v328 = vsub.s32 0, %v327
  %v329 = vrot.slane %v30, %v328
  %v330 = vmul.f32 %v264, %v329
  %v331 = vmul.f32 %v268, %v329
  %v332 = vmul.f32 %v272, %v329
  %v333 = vmul.f32 %v276, %v329
  %v334 = vmul.f32 %v280, %v329
  %v335 = vmul.f32 %v284, %v329
  %v336 = vmul.f32 %v288, %v329
  %v337 = vmul.f32 %v292, %v329
  %v338 = vmul.f32 %v296, %v329
  %v339 = vmul.f32 %v300, %v329
  %v340 = vmul.f32 %v304, %v329
  %v341 = vmul.f32 %v308, %v329
  %v342 = vmul.f32 %v312, %v329
  %v343 = vmul.f32 %v316, %v329
  %v344 = vmul.f32 %v320, %v329
  %v345 = vmul.f32 %v324, %v329
  %v346 = vadd.f32 %v246, %v330
  %v347 = vadd.f32 %v247, %v331
  %v348 = vadd.f32 %v248, %v332
  %v349 = vadd.f32 %v249, %v333
  %v350 = vadd.f32 %v250, %v334
  %v351 = vadd.f32 %v251, %v335
  %v352 = vadd.f32 %v252, %v336
  %v353 = vadd.f32 %v253, %v337
  %v354 = vadd.f32 %v254, %v338
  %v355 = vadd.f32 %v255, %v339
  %v356 = vadd.f32 %v256, %v340
  %v357 = vadd.f32 %v257, %v341
  %v358 = vadd.f32 %v258, %v342
  %v359 = vadd.f32 %v259, %v343
  %v360 = vadd.f32 %v260, %v344
  %v361 = vadd.f32 %v261, %v345
  %362 = vset.pattern.permute.xlu0 1
  %363 = vperm.xlu0 %362, %v32
  %v364 = vpop.permute.xlu0 %363
  %366 = vset.pattern.permute.xlu0 1
  %367 = vperm.xlu0 %366, %v33
  %v368 = vpop.permute.xlu0 %367
  %370 = vset.pattern.permute.xlu0 1
  %371 = vperm.xlu0 %370, %v34
  %v372 = vpop.permute.xlu0 %371
  %374 = vset.pattern.permute.xlu0 1
  %375 = vperm.xlu0 %374, %v35
  %v376 = vpop.permute.xlu0 %375
  %378 = vset.pattern.permute.xlu0 1
  %379 = vperm.xlu0 %378, %v36
  %v380 = vpop.permute.xlu0 %379
  %382 = vset.pattern.permute.xlu0 1
  %383 = vperm.xlu0 %382, %v37
  %v384 = vpop.permute.xlu0 %383
  %386 = vset.pattern.permute.xlu0 1
  %387 = vperm.xlu0 %386, %v38
  %v388 = vpop.permute.xlu0 %387
  %390 = vset.pattern.permute.xlu0 1
  %391 = vperm.xlu0 %390, %v39
  %v392 = vpop.permute.xlu0 %391
  %394 = vset.pattern.permute.xlu0 1
  %395 = vperm.xlu0 %394, %v40
  %v396 = vpop.permute.xlu0 %395
  %398 = vset.pattern.permute.xlu0 1
  %399 = vperm.xlu0 %398, %v41
  %v400 = vpop.permute.xlu0 %399
  %402 = vset.pattern.permute.xlu0 1
  %403 = vperm.xlu0 %402, %v42
  %v404 = vpop.permute.xlu0 %403
  %406 = vset.pattern.permute.xlu0 1
  %407 = vperm.xlu0 %406, %v43
  %v408 = vpop.permute.xlu0 %407
  %410 = vset.pattern.permute.xlu0 1
  %411 = vperm.xlu0 %410, %v44
  %v412 = vpop.permute.xlu0 %411
  %414 = vset.pattern.permute.xlu0 1
  %415 = vperm.xlu0 %414, %v45
  %v416 = vpop.permute.xlu0 %415
  %418 = vset.pattern.permute.xlu0 1
  %419 = vperm.xlu0 %418, %v46
  %v420 = vpop.permute.xlu0 %419
  %422 = vset.pattern.permute.xlu0 1
  %423 = vperm.xlu0 %422, %v47
  %v424 = vpop.permute.xlu0 %423
  %v426 = vlaneseq
  %v427 = vshrl.u32 %v426, 7
  %v428 = vsub.s32 1, %v427
  %v429 = vrot.slane %v30, %v428
  %v430 = vmul.f32 %v364, %v429
  %v431 = vmul.f32 %v368, %v429
  %v432 = vmul.f32 %v372, %v429
  %v433 = vmul.f32 %v376, %v429
  %v434 = vmul.f32 %v380, %v429
  %v435 = vmul.f32 %v384, %v429
  %v436 = vmul.f32 %v388, %v429
  %v437 = vmul.f32 %v392, %v429
  %v438 = vmul.f32 %v396, %v429
  %v439 = vmul.f32 %v400, %v429
  %v440 = vmul.f32 %v404, %v429
  %v441 = vmul.f32 %v408, %v429
  %v442 = vmul.f32 %v412, %v429
  %v443 = vmul.f32 %v416, %v429
  %v444 = vmul.f32 %v420, %v429
  %v445 = vmul.f32 %v424, %v429
  %v446 = vadd.f32 %v346, %v430
  %v447 = vadd.f32 %v347, %v431
  %v448 = vadd.f32 %v348, %v432
  %v449 = vadd.f32 %v349, %v433
  %v450 = vadd.f32 %v350, %v434
  %v451 = vadd.f32 %v351, %v435
  %v452 = vadd.f32 %v352, %v436
  %v453 = vadd.f32 %v353, %v437
  %v454 = vadd.f32 %v354, %v438
  %v455 = vadd.f32 %v355, %v439
  %v456 = vadd.f32 %v356, %v440
  %v457 = vadd.f32 %v357, %v441
  %v458 = vadd.f32 %v358, %v442
  %v459 = vadd.f32 %v359, %v443
  %v460 = vadd.f32 %v360, %v444
  %v461 = vadd.f32 %v361, %v445
  %v462 = vmul.f32 %v446, 0.5
  %v463 = vmul.f32 %v447, 0.5
  %v464 = vmul.f32 %v448, 0.5
  %v465 = vmul.f32 %v449, 0.5
  %v466 = vmul.f32 %v450, 0.5
  %v467 = vmul.f32 %v451, 0.5
  %v468 = vmul.f32 %v452, 0.5
  %v469 = vmul.f32 %v453, 0.5
  %v470 = vmul.f32 %v454, 0.5
  %v471 = vmul.f32 %v455, 0.5
  %v472 = vmul.f32 %v456, 0.5
  %v473 = vmul.f32 %v457, 0.5
  %v474 = vmul.f32 %v458, 0.5
  %v475 = vmul.f32 %v459, 0.5
  %v476 = vmul.f32 %v460, 0.5
  %v477 = vmul.f32 %v461, 0.5
  %v478 = vtanh.pop %v462
  %v479 = vtanh.pop %v463
  %v480 = vtanh.pop %v464
  %v481 = vtanh.pop %v465
  %v482 = vtanh.pop %v466
  %v483 = vtanh.pop %v467
  %v484 = vtanh.pop %v468
  %v485 = vtanh.pop %v469
  %v486 = vtanh.pop %v470
  %v487 = vtanh.pop %v471
  %v488 = vtanh.pop %v472
  %v489 = vtanh.pop %v473
  %v490 = vtanh.pop %v474
  %v491 = vtanh.pop %v475
  %v492 = vtanh.pop %v476
  %v493 = vtanh.pop %v477
  %v494 = vadd.f32 %v478, 1.0
  %v495 = vadd.f32 %v479, 1.0
  %v496 = vadd.f32 %v480, 1.0
  %v497 = vadd.f32 %v481, 1.0
  %v498 = vadd.f32 %v482, 1.0
  %v499 = vadd.f32 %v483, 1.0
  %v500 = vadd.f32 %v484, 1.0
  %v501 = vadd.f32 %v485, 1.0
  %v502 = vadd.f32 %v486, 1.0
  %v503 = vadd.f32 %v487, 1.0
  %v504 = vadd.f32 %v488, 1.0
  %v505 = vadd.f32 %v489, 1.0
  %v506 = vadd.f32 %v490, 1.0
  %v507 = vadd.f32 %v491, 1.0
  %v508 = vadd.f32 %v492, 1.0
  %v509 = vadd.f32 %v493, 1.0
  %v510 = vmul.f32 %v462, %v494
  %v511 = vmul.f32 %v463, %v495
  %v512 = vmul.f32 %v464, %v496
  %v513 = vmul.f32 %v465, %v497
  %v514 = vmul.f32 %v466, %v498
  %v515 = vmul.f32 %v467, %v499
  %v516 = vmul.f32 %v468, %v500
  %v517 = vmul.f32 %v469, %v501
  %v518 = vmul.f32 %v470, %v502
  %v519 = vmul.f32 %v471, %v503
  %v520 = vmul.f32 %v472, %v504
  %v521 = vmul.f32 %v473, %v505
  %v522 = vmul.f32 %v474, %v506
  %v523 = vmul.f32 %v475, %v507
  %v524 = vmul.f32 %v476, %v508
  %v525 = vmul.f32 %v477, %v509
  %v526 = vld [vmem:[%s4] sm:$0xf]
  %v527 = vld [vmem:[%s4 + $0x4] sm:$0xf]
  %v528 = vld [vmem:[%s4 + $0x8] sm:$0xf]
  %v529 = vld [vmem:[%s4 + $0xc] sm:$0xf]
  %v530 = vld [vmem:[%s4 + $0x10] sm:$0xf]
  %v531 = vld [vmem:[%s4 + $0x14] sm:$0xf]
  %v532 = vld [vmem:[%s4 + $0x18] sm:$0xf]
  %v533 = vld [vmem:[%s4 + $0x1c] sm:$0xf]
  %v534 = vld [vmem:[%s4 + $0x20] sm:$0xf]
  %v535 = vld [vmem:[%s4 + $0x24] sm:$0xf]
  %v536 = vld [vmem:[%s4 + $0x28] sm:$0xf]
  %v537 = vld [vmem:[%s4 + $0x2c] sm:$0xf]
  %v538 = vld [vmem:[%s4 + $0x30] sm:$0xf]
  %v539 = vld [vmem:[%s4 + $0x34] sm:$0xf]
  %v540 = vld [vmem:[%s4 + $0x38] sm:$0xf]
  %v541 = vld [vmem:[%s4 + $0x3c] sm:$0xf]
  %v542 = vpack.c.bf16 %v511, %v510
  %v543 = vpack.c.bf16 %v513, %v512
  %v544 = vpack.c.bf16 %v515, %v514
  %v545 = vpack.c.bf16 %v517, %v516
  %v546 = vpack.c.bf16 %v519, %v518
  %v547 = vpack.c.bf16 %v521, %v520
  %v548 = vpack.c.bf16 %v523, %v522
  %v549 = vpack.c.bf16 %v525, %v524
  %v550 = vld [vmem:[%s5] sm:$0xff]
  %v551 = vld [vmem:[%s5 + $0x8] sm:$0xff]
  %v552 = vld [vmem:[%s5 + $0x10] sm:$0xff]
  %v553 = vld [vmem:[%s5 + $0x18] sm:$0xff]
  %v554 = vld [vmem:[%s5 + $0x20] sm:$0xff]
  %v555 = vld [vmem:[%s5 + $0x28] sm:$0xff]
  %v556 = vld [vmem:[%s5 + $0x30] sm:$0xff]
  %v557 = vld [vmem:[%s5 + $0x38] sm:$0xff]
  %v558 = vld [vmem:[%s5 + $0x40] sm:$0xff]
  %v559 = vld [vmem:[%s5 + $0x48] sm:$0xff]
  %v560 = vld [vmem:[%s5 + $0x50] sm:$0xff]
  %v561 = vld [vmem:[%s5 + $0x58] sm:$0xff]
  %v562 = vld [vmem:[%s5 + $0x60] sm:$0xff]
  %v563 = vld [vmem:[%s5 + $0x68] sm:$0xff]
  %v564 = vld [vmem:[%s5 + $0x70] sm:$0xff]
  %v565 = vld [vmem:[%s5 + $0x78] sm:$0xff]
  %567 = vset.pattern.permute.xlu0 0
  %568 = vperm.xlu0 %567, %v550
  %v569 = vpop.permute.xlu0 %568
  %572 = vset.pattern.permute.xlu0 0
  %573 = vperm.xlu0 %572, %v551
  %v574 = vpop.permute.xlu0 %573
  %577 = vset.pattern.permute.xlu0 0
  %578 = vperm.xlu0 %577, %v552
  %v579 = vpop.permute.xlu0 %578
  %582 = vset.pattern.permute.xlu0 0
  %583 = vperm.xlu0 %582, %v553
  %v584 = vpop.permute.xlu0 %583
  %587 = vset.pattern.permute.xlu0 0
  %588 = vperm.xlu0 %587, %v554
  %v589 = vpop.permute.xlu0 %588
  %592 = vset.pattern.permute.xlu0 0
  %593 = vperm.xlu0 %592, %v555
  %v594 = vpop.permute.xlu0 %593
  %597 = vset.pattern.permute.xlu0 0
  %598 = vperm.xlu0 %597, %v556
  %v599 = vpop.permute.xlu0 %598
  %602 = vset.pattern.permute.xlu0 0
  %603 = vperm.xlu0 %602, %v557
  %v604 = vpop.permute.xlu0 %603
  %607 = vset.pattern.permute.xlu0 0
  %608 = vperm.xlu0 %607, %v558
  %v609 = vpop.permute.xlu0 %608
  %612 = vset.pattern.permute.xlu0 0
  %613 = vperm.xlu0 %612, %v559
  %v614 = vpop.permute.xlu0 %613
  %617 = vset.pattern.permute.xlu0 0
  %618 = vperm.xlu0 %617, %v560
  %v619 = vpop.permute.xlu0 %618
  %622 = vset.pattern.permute.xlu0 0
  %623 = vperm.xlu0 %622, %v561
  %v624 = vpop.permute.xlu0 %623
  %627 = vset.pattern.permute.xlu0 0
  %628 = vperm.xlu0 %627, %v562
  %v629 = vpop.permute.xlu0 %628
  %632 = vset.pattern.permute.xlu0 0
  %633 = vperm.xlu0 %632, %v563
  %v634 = vpop.permute.xlu0 %633
  %637 = vset.pattern.permute.xlu0 0
  %638 = vperm.xlu0 %637, %v564
  %v639 = vpop.permute.xlu0 %638
  %642 = vset.pattern.permute.xlu0 0
  %643 = vperm.xlu0 %642, %v565
  %v644 = vpop.permute.xlu0 %643
  %v662 = vunpack.c.l.b16 %v526
  %v663 = vunpack.c.l.b16 %v527
  %v664 = vunpack.c.l.b16 %v528
  %v665 = vunpack.c.l.b16 %v529
  %v666 = vunpack.c.l.b16 %v530
  %v667 = vunpack.c.l.b16 %v531
  %v668 = vunpack.c.l.b16 %v532
  %v669 = vunpack.c.l.b16 %v533
  %v670 = vunpack.c.l.b16 %v534
  %v671 = vunpack.c.l.b16 %v535
  %v672 = vunpack.c.l.b16 %v536
  %v673 = vunpack.c.l.b16 %v537
  %v674 = vunpack.c.l.b16 %v538
  %v675 = vunpack.c.l.b16 %v539
  %v676 = vunpack.c.l.b16 %v540
  %v677 = vunpack.c.l.b16 %v541
  %v678 = vpack.c.b16 %v663, %v662
  %v679 = vpack.c.b16 %v665, %v664
  %v680 = vpack.c.b16 %v667, %v666
  %v681 = vpack.c.b16 %v669, %v668
  %v682 = vpack.c.b16 %v671, %v670
  %v683 = vpack.c.b16 %v673, %v672
  %v684 = vpack.c.b16 %v675, %v674
  %v685 = vpack.c.b16 %v677, %v676
  %694 = vmatprep.subr.bf16.mxu0 0
  %695 = vmatpush1.bf16.msra.mxu0 %v542
  %696 = vmatprep.subr.bf16.mxu0 0
  %697 = vmatpush1.bf16.msra.mxu0 %v543
  %698 = vmatprep.subr.bf16.mxu0 0
  %699 = vmatpush1.bf16.msra.mxu0 %v544
  %700 = vmatprep.subr.bf16.mxu0 0
  %701 = vmatpush1.bf16.msra.mxu0 %v545
  %702 = vmatprep.subr.bf16.mxu0 0
  %703 = vmatpush1.bf16.msra.mxu0 %v546
  %704 = vmatprep.subr.bf16.mxu0 0
  %705 = vmatpush1.bf16.msra.mxu0 %v547
  %706 = vmatprep.subr.bf16.mxu0 0
  %707 = vmatpush1.bf16.msra.mxu0 %v548
  %708 = vmatprep.subr.bf16.mxu0 0
  %709 = vmatpush1.bf16.msra.mxu0 %v549
  %710 = vmatprep.subr.bf16.mxu0 0
  %711 = vmatpush1.bf16.msra.mxu0 0
  %712 = vmatprep.subr.bf16.mxu0 0
  %713 = vmatpush1.bf16.msra.mxu0 0
  %714 = vmatprep.subr.bf16.mxu0 0
  %715 = vmatpush1.bf16.msra.mxu0 0
  %716 = vmatprep.subr.bf16.mxu0 0
  %717 = vmatpush1.bf16.msra.mxu0 0
  %718 = vmatprep.subr.bf16.mxu0 0
  %719 = vmatpush1.bf16.msra.mxu0 0
  %720 = vmatprep.subr.bf16.mxu0 0
  %721 = vmatpush1.bf16.msra.mxu0 0
  %722 = vmatprep.subr.bf16.mxu0 0
  %723 = vmatpush1.bf16.msra.mxu0 0
  %724 = vmatprep.subr.bf16.mxu0 0
  %725 = vmatpush1.bf16.msra.mxu0 0
  %726 = vmatprep.mubr.bf16.mxu0 0
  %727 = vmatmul.mubr.bf16.gmra.mrb[0].mxu0 %v678
  %v728 = vpop.f32.mrb[0].mxu0
  %v729 = vadd.f32 %v569, %v728
  %v730 = vpop.f32.mrb[0].mxu0
  %v731 = vpop.f32.mrb[0].mxu0
  %v732 = vadd.f32 %v574, %v731
  %v733 = vpop.f32.mrb[0].mxu0
  %734 = vmatprep.mubr.bf16.mxu0 0
  %735 = vmatmul.mubr.bf16.gmra.mrb[0].mxu0 %v679
  %v736 = vpop.f32.mrb[0].mxu0
  %v737 = vadd.f32 %v579, %v736
  %v738 = vpop.f32.mrb[0].mxu0
  %v739 = vpop.f32.mrb[0].mxu0
  %v740 = vadd.f32 %v584, %v739
  %v741 = vpop.f32.mrb[0].mxu0
  %742 = vmatprep.mubr.bf16.mxu0 0
  %743 = vmatmul.mubr.bf16.gmra.mrb[0].mxu0 %v680
  %v744 = vpop.f32.mrb[0].mxu0
  %v745 = vadd.f32 %v589, %v744
  %v746 = vpop.f32.mrb[0].mxu0
  %v747 = vpop.f32.mrb[0].mxu0
  %v748 = vadd.f32 %v594, %v747
  %v749 = vpop.f32.mrb[0].mxu0
  %750 = vmatprep.mubr.bf16.mxu0 0
  %751 = vmatmul.mubr.bf16.gmra.mrb[0].mxu0 %v681
  %v752 = vpop.f32.mrb[0].mxu0
  %v753 = vadd.f32 %v599, %v752
  %v754 = vpop.f32.mrb[0].mxu0
  %v755 = vpop.f32.mrb[0].mxu0
  %v756 = vadd.f32 %v604, %v755
  %v757 = vpop.f32.mrb[0].mxu0
  %758 = vmatprep.mubr.bf16.mxu0 0
  %759 = vmatmul.mubr.bf16.gmra.mrb[0].mxu0 %v682
  %v760 = vpop.f32.mrb[0].mxu0
  %v761 = vadd.f32 %v609, %v760
  %v762 = vpop.f32.mrb[0].mxu0
  %v763 = vpop.f32.mrb[0].mxu0
  %v764 = vadd.f32 %v614, %v763
  %v765 = vpop.f32.mrb[0].mxu0
  %766 = vmatprep.mubr.bf16.mxu0 0
  %767 = vmatmul.mubr.bf16.gmra.mrb[0].mxu0 %v683
  %v768 = vpop.f32.mrb[0].mxu0
  %v769 = vadd.f32 %v619, %v768
  %v770 = vpop.f32.mrb[0].mxu0
  %v771 = vpop.f32.mrb[0].mxu0
  %v772 = vadd.f32 %v624, %v771
  %v773 = vpop.f32.mrb[0].mxu0
  %774 = vmatprep.mubr.bf16.mxu0 0
  %775 = vmatmul.mubr.bf16.gmra.mrb[0].mxu0 %v684
  %v776 = vpop.f32.mrb[0].mxu0
  %v777 = vadd.f32 %v629, %v776
  %v778 = vpop.f32.mrb[0].mxu0
  %v779 = vpop.f32.mrb[0].mxu0
  %v780 = vadd.f32 %v634, %v779
  %v781 = vpop.f32.mrb[0].mxu0
  %782 = vmatprep.mubr.bf16.mxu0 0
  %783 = vmatmul.mubr.bf16.gmra.mrb[0].mxu0 %v685
  %v784 = vpop.f32.mrb[0].mxu0
  %v785 = vadd.f32 %v639, %v784
  %v786 = vpop.f32.mrb[0].mxu0
  %v787 = vpop.f32.mrb[0].mxu0
  %v788 = vadd.f32 %v644, %v787
  %v789 = vpop.f32.mrb[0].mxu0
  %790 = vdwg.mxu0
  %v791 = vmul.f32 %v729, 0.5
  %v792 = vmul.f32 %v732, 0.5
  %v793 = vmul.f32 %v737, 0.5
  %v794 = vmul.f32 %v740, 0.5
  %v795 = vmul.f32 %v745, 0.5
  %v796 = vmul.f32 %v748, 0.5
  %v797 = vmul.f32 %v753, 0.5
  %v798 = vmul.f32 %v756, 0.5
  %v799 = vmul.f32 %v761, 0.5
  %v800 = vmul.f32 %v764, 0.5
  %v801 = vmul.f32 %v769, 0.5
  %v802 = vmul.f32 %v772, 0.5
  %v803 = vmul.f32 %v777, 0.5
  %v804 = vmul.f32 %v780, 0.5
  %v805 = vmul.f32 %v785, 0.5
  %v806 = vmul.f32 %v788, 0.5
  %v807 = vtanh.pop %v791
  %v808 = vtanh.pop %v792
  %v809 = vtanh.pop %v793
  %v810 = vtanh.pop %v794
  %v811 = vtanh.pop %v795
  %v812 = vtanh.pop %v796
  %v813 = vtanh.pop %v797
  %v814 = vtanh.pop %v798
  %v815 = vtanh.pop %v799
  %v816 = vtanh.pop %v800
  %v817 = vtanh.pop %v801
  %v818 = vtanh.pop %v802
  %v819 = vtanh.pop %v803
  %v820 = vtanh.pop %v804
  %v821 = vtanh.pop %v805
  %v822 = vtanh.pop %v806
  %v823 = vadd.f32 %v807, 1.0
  %v824 = vadd.f32 %v808, 1.0
  %v825 = vadd.f32 %v809, 1.0
  %v826 = vadd.f32 %v810, 1.0
  %v827 = vadd.f32 %v811, 1.0
  %v828 = vadd.f32 %v812, 1.0
  %v829 = vadd.f32 %v813, 1.0
  %v830 = vadd.f32 %v814, 1.0
  %v831 = vadd.f32 %v815, 1.0
  %v832 = vadd.f32 %v816, 1.0
  %v833 = vadd.f32 %v817, 1.0
  %v834 = vadd.f32 %v818, 1.0
  %v835 = vadd.f32 %v819, 1.0
  %v836 = vadd.f32 %v820, 1.0
  %v837 = vadd.f32 %v821, 1.0
  %v838 = vadd.f32 %v822, 1.0
  %v839 = vmul.f32 %v791, %v823
  %v840 = vmul.f32 %v792, %v824
  %v841 = vmul.f32 %v793, %v825
  %v842 = vmul.f32 %v794, %v826
  %v843 = vmul.f32 %v795, %v827
  %v844 = vmul.f32 %v796, %v828
  %v845 = vmul.f32 %v797, %v829
  %v846 = vmul.f32 %v798, %v830
  %v847 = vmul.f32 %v799, %v831
  %v848 = vmul.f32 %v800, %v832
  %v849 = vmul.f32 %v801, %v833
  %v850 = vmul.f32 %v802, %v834
  %v851 = vmul.f32 %v803, %v835
  %v852 = vmul.f32 %v804, %v836
  %v853 = vmul.f32 %v805, %v837
  %v854 = vmul.f32 %v806, %v838
  %s855 = scalar_lea.vmem %s4, 64
  %v856 = vld [vmem:[%s855] sm:$0xf]
  %v857 = vld [vmem:[%s855 + $0x4] sm:$0xf]
  %v858 = vld [vmem:[%s855 + $0x8] sm:$0xf]
  %v859 = vld [vmem:[%s855 + $0xc] sm:$0xf]
  %v860 = vld [vmem:[%s855 + $0x10] sm:$0xf]
  %v861 = vld [vmem:[%s855 + $0x14] sm:$0xf]
  %v862 = vld [vmem:[%s855 + $0x18] sm:$0xf]
  %v863 = vld [vmem:[%s855 + $0x1c] sm:$0xf]
  %v864 = vld [vmem:[%s855 + $0x20] sm:$0xf]
  %v865 = vld [vmem:[%s855 + $0x24] sm:$0xf]
  %v866 = vld [vmem:[%s855 + $0x28] sm:$0xf]
  %v867 = vld [vmem:[%s855 + $0x2c] sm:$0xf]
  %v868 = vld [vmem:[%s855 + $0x30] sm:$0xf]
  %v869 = vld [vmem:[%s855 + $0x34] sm:$0xf]
  %v870 = vld [vmem:[%s855 + $0x38] sm:$0xf]
  %v871 = vld [vmem:[%s855 + $0x3c] sm:$0xf]
  %v872 = vpack.c.bf16 %v840, %v839
  %v873 = vpack.c.bf16 %v842, %v841
  %v874 = vpack.c.bf16 %v844, %v843
  %v875 = vpack.c.bf16 %v846, %v845
  %v876 = vpack.c.bf16 %v848, %v847
  %v877 = vpack.c.bf16 %v850, %v849
  %v878 = vpack.c.bf16 %v852, %v851
  %v879 = vpack.c.bf16 %v854, %v853
  %s880 = scalar_lea.vmem %s5, 128
  %v881 = vld [vmem:[%s880] sm:$0xff]
  %v882 = vld [vmem:[%s880 + $0x8] sm:$0xff]
  %v883 = vld [vmem:[%s880 + $0x10] sm:$0xff]
  %v884 = vld [vmem:[%s880 + $0x18] sm:$0xff]
  %v885 = vld [vmem:[%s880 + $0x20] sm:$0xff]
  %v886 = vld [vmem:[%s880 + $0x28] sm:$0xff]
  %v887 = vld [vmem:[%s880 + $0x30] sm:$0xff]
  %v888 = vld [vmem:[%s880 + $0x38] sm:$0xff]
  %v889 = vld [vmem:[%s880 + $0x40] sm:$0xff]
  %v890 = vld [vmem:[%s880 + $0x48] sm:$0xff]
  %v891 = vld [vmem:[%s880 + $0x50] sm:$0xff]
  %v892 = vld [vmem:[%s880 + $0x58] sm:$0xff]
  %v893 = vld [vmem:[%s880 + $0x60] sm:$0xff]
  %v894 = vld [vmem:[%s880 + $0x68] sm:$0xff]
  %v895 = vld [vmem:[%s880 + $0x70] sm:$0xff]
  %v896 = vld [vmem:[%s880 + $0x78] sm:$0xff]
  %898 = vset.pattern.permute.xlu0 0
  %899 = vperm.xlu0 %898, %v881
  %v900 = vpop.permute.xlu0 %899
  %903 = vset.pattern.permute.xlu0 0
  %904 = vperm.xlu0 %903, %v882
  %v905 = vpop.permute.xlu0 %904
  %908 = vset.pattern.permute.xlu0 0
  %909 = vperm.xlu0 %908, %v883
  %v910 = vpop.permute.xlu0 %909
  %913 = vset.pattern.permute.xlu0 0
  %914 = vperm.xlu0 %913, %v884
  %v915 = vpop.permute.xlu0 %914
  %918 = vset.pattern.permute.xlu0 0
  %919 = vperm.xlu0 %918, %v885
  %v920 = vpop.permute.xlu0 %919
  %923 = vset.pattern.permute.xlu0 0
  %924 = vperm.xlu0 %923, %v886
  %v925 = vpop.permute.xlu0 %924
  %928 = vset.pattern.permute.xlu0 0
  %929 = vperm.xlu0 %928, %v887
  %v930 = vpop.permute.xlu0 %929
  %933 = vset.pattern.permute.xlu0 0
  %934 = vperm.xlu0 %933, %v888
  %v935 = vpop.permute.xlu0 %934
  %938 = vset.pattern.permute.xlu0 0
  %939 = vperm.xlu0 %938, %v889
  %v940 = vpop.permute.xlu0 %939
  %943 = vset.pattern.permute.xlu0 0
  %944 = vperm.xlu0 %943, %v890
  %v945 = vpop.permute.xlu0 %944
  %948 = vset.pattern.permute.xlu0 0
  %949 = vperm.xlu0 %948, %v891
  %v950 = vpop.permute.xlu0 %949
  %953 = vset.pattern.permute.xlu0 0
  %954 = vperm.xlu0 %953, %v892
  %v955 = vpop.permute.xlu0 %954
  %958 = vset.pattern.permute.xlu0 0
  %959 = vperm.xlu0 %958, %v893
  %v960 = vpop.permute.xlu0 %959
  %963 = vset.pattern.permute.xlu0 0
  %964 = vperm.xlu0 %963, %v894
  %v965 = vpop.permute.xlu0 %964
  %968 = vset.pattern.permute.xlu0 0
  %969 = vperm.xlu0 %968, %v895
  %v970 = vpop.permute.xlu0 %969
  %973 = vset.pattern.permute.xlu0 0
  %974 = vperm.xlu0 %973, %v896
  %v975 = vpop.permute.xlu0 %974
  %v993 = vunpack.c.l.b16 %v856
  %v994 = vunpack.c.l.b16 %v857
  %v995 = vunpack.c.l.b16 %v858
  %v996 = vunpack.c.l.b16 %v859
  %v997 = vunpack.c.l.b16 %v860
  %v998 = vunpack.c.l.b16 %v861
  %v999 = vunpack.c.l.b16 %v862
  %v1000 = vunpack.c.l.b16 %v863
  %v1001 = vunpack.c.l.b16 %v864
  %v1002 = vunpack.c.l.b16 %v865
  %v1003 = vunpack.c.l.b16 %v866
  %v1004 = vunpack.c.l.b16 %v867
  %v1005 = vunpack.c.l.b16 %v868
  %v1006 = vunpack.c.l.b16 %v869
  %v1007 = vunpack.c.l.b16 %v870
  %v1008 = vunpack.c.l.b16 %v871
  %v1009 = vpack.c.b16 %v994, %v993
  %v1010 = vpack.c.b16 %v996, %v995
  %v1011 = vpack.c.b16 %v998, %v997
  %v1012 = vpack.c.b16 %v1000, %v999
  %v1013 = vpack.c.b16 %v1002, %v1001
  %v1014 = vpack.c.b16 %v1004, %v1003
  %v1015 = vpack.c.b16 %v1006, %v1005
  %v1016 = vpack.c.b16 %v1008, %v1007
  %1025 = vmatprep.subr.bf16.mxu0 0
  %1026 = vmatpush1.bf16.msra.mxu0 %v872
  %1027 = vmatprep.subr.bf16.mxu0 0
  %1028 = vmatpush1.bf16.msra.mxu0 %v873
  %1029 = vmatprep.subr.bf16.mxu0 0
  %1030 = vmatpush1.bf16.msra.mxu0 %v874
  %1031 = vmatprep.subr.bf16.mxu0 0
  %1032 = vmatpush1.bf16.msra.mxu0 %v875
  %1033 = vmatprep.subr.bf16.mxu0 0
  %1034 = vmatpush1.bf16.msra.mxu0 %v876
  %1035 = vmatprep.subr.bf16.mxu0 0
  %1036 = vmatpush1.bf16.msra.mxu0 %v877
  %1037 = vmatprep.subr.bf16.mxu0 0
  %1038 = vmatpush1.bf16.msra.mxu0 %v878
  %1039 = vmatprep.subr.bf16.mxu0 0
  %1040 = vmatpush1.bf16.msra.mxu0 %v879
  %1041 = vmatprep.subr.bf16.mxu0 0
  %1042 = vmatpush1.bf16.msra.mxu0 0
  %1043 = vmatprep.subr.bf16.mxu0 0
  %1044 = vmatpush1.bf16.msra.mxu0 0
  %1045 = vmatprep.subr.bf16.mxu0 0
  %1046 = vmatpush1.bf16.msra.mxu0 0
  %1047 = vmatprep.subr.bf16.mxu0 0
  %1048 = vmatpush1.bf16.msra.mxu0 0
  %1049 = vmatprep.subr.bf16.mxu0 0
  %1050 = vmatpush1.bf16.msra.mxu0 0
  %1051 = vmatprep.subr.bf16.mxu0 0
  %1052 = vmatpush1.bf16.msra.mxu0 0
  %1053 = vmatprep.subr.bf16.mxu0 0
  %1054 = vmatpush1.bf16.msra.mxu0 0
  %1055 = vmatprep.subr.bf16.mxu0 0
  %1056 = vmatpush1.bf16.msra.mxu0 0
  %1057 = vmatprep.mubr.bf16.mxu0 0
  %1058 = vmatmul.mubr.bf16.gmra.mrb[0].mxu0 %v1009
  %v1059 = vpop.f32.mrb[0].mxu0
  %v1060 = vadd.f32 %v900, %v1059
  %v1061 = vpop.f32.mrb[0].mxu0
  %v1062 = vpop.f32.mrb[0].mxu0
  %v1063 = vadd.f32 %v905, %v1062
  %v1064 = vpop.f32.mrb[0].mxu0
  %1065 = vmatprep.mubr.bf16.mxu0 0
  %1066 = vmatmul.mubr.bf16.gmra.mrb[0].mxu0 %v1010
  %v1067 = vpop.f32.mrb[0].mxu0
  %v1068 = vadd.f32 %v910, %v1067
  %v1069 = vpop.f32.mrb[0].mxu0
  %v1070 = vpop.f32.mrb[0].mxu0
  %v1071 = vadd.f32 %v915, %v1070
  %v1072 = vpop.f32.mrb[0].mxu0
  %1073 = vmatprep.mubr.bf16.mxu0 0
  %1074 = vmatmul.mubr.bf16.gmra.mrb[0].mxu0 %v1011
  %v1075 = vpop.f32.mrb[0].mxu0
  %v1076 = vadd.f32 %v920, %v1075
  %v1077 = vpop.f32.mrb[0].mxu0
  %v1078 = vpop.f32.mrb[0].mxu0
  %v1079 = vadd.f32 %v925, %v1078
  %v1080 = vpop.f32.mrb[0].mxu0
  %1081 = vmatprep.mubr.bf16.mxu0 0
  %1082 = vmatmul.mubr.bf16.gmra.mrb[0].mxu0 %v1012
  %v1083 = vpop.f32.mrb[0].mxu0
  %v1084 = vadd.f32 %v930, %v1083
  %v1085 = vpop.f32.mrb[0].mxu0
  %v1086 = vpop.f32.mrb[0].mxu0
  %v1087 = vadd.f32 %v935, %v1086
  %v1088 = vpop.f32.mrb[0].mxu0
  %1089 = vmatprep.mubr.bf16.mxu0 0
  %1090 = vmatmul.mubr.bf16.gmra.mrb[0].mxu0 %v1013
  %v1091 = vpop.f32.mrb[0].mxu0
  %v1092 = vadd.f32 %v940, %v1091
  %v1093 = vpop.f32.mrb[0].mxu0
  %v1094 = vpop.f32.mrb[0].mxu0
  %v1095 = vadd.f32 %v945, %v1094
  %v1096 = vpop.f32.mrb[0].mxu0
  %1097 = vmatprep.mubr.bf16.mxu0 0
  %1098 = vmatmul.mubr.bf16.gmra.mrb[0].mxu0 %v1014
  %v1099 = vpop.f32.mrb[0].mxu0
  %v1100 = vadd.f32 %v950, %v1099
  %v1101 = vpop.f32.mrb[0].mxu0
  %v1102 = vpop.f32.mrb[0].mxu0
  %v1103 = vadd.f32 %v955, %v1102
  %v1104 = vpop.f32.mrb[0].mxu0
  %1105 = vmatprep.mubr.bf16.mxu0 0
  %1106 = vmatmul.mubr.bf16.gmra.mrb[0].mxu0 %v1015
  %v1107 = vpop.f32.mrb[0].mxu0
  %v1108 = vadd.f32 %v960, %v1107
  %v1109 = vpop.f32.mrb[0].mxu0
  %v1110 = vpop.f32.mrb[0].mxu0
  %v1111 = vadd.f32 %v965, %v1110
  %v1112 = vpop.f32.mrb[0].mxu0
  %1113 = vmatprep.mubr.bf16.mxu0 0
  %1114 = vmatmul.mubr.bf16.gmra.mrb[0].mxu0 %v1016
  %v1115 = vpop.f32.mrb[0].mxu0
  %v1116 = vadd.f32 %v970, %v1115
  %v1117 = vpop.f32.mrb[0].mxu0
  %v1118 = vpop.f32.mrb[0].mxu0
  %v1119 = vadd.f32 %v975, %v1118
  %v1120 = vpop.f32.mrb[0].mxu0
  %1121 = vdwg.mxu0
  %v1122 = vmul.f32 %v1060, 0.5
  %v1123 = vmul.f32 %v1063, 0.5
  %v1124 = vmul.f32 %v1068, 0.5
  %v1125 = vmul.f32 %v1071, 0.5
  %v1126 = vmul.f32 %v1076, 0.5
  %v1127 = vmul.f32 %v1079, 0.5
  %v1128 = vmul.f32 %v1084, 0.5
  %v1129 = vmul.f32 %v1087, 0.5
  %v1130 = vmul.f32 %v1092, 0.5
  %v1131 = vmul.f32 %v1095, 0.5
  %v1132 = vmul.f32 %v1100, 0.5
  %v1133 = vmul.f32 %v1103, 0.5
  %v1134 = vmul.f32 %v1108, 0.5
  %v1135 = vmul.f32 %v1111, 0.5
  %v1136 = vmul.f32 %v1116, 0.5
  %v1137 = vmul.f32 %v1119, 0.5
  %v1138 = vtanh.pop %v1122
  %v1139 = vtanh.pop %v1123
  %v1140 = vtanh.pop %v1124
  %v1141 = vtanh.pop %v1125
  %v1142 = vtanh.pop %v1126
  %v1143 = vtanh.pop %v1127
  %v1144 = vtanh.pop %v1128
  %v1145 = vtanh.pop %v1129
  %v1146 = vtanh.pop %v1130
  %v1147 = vtanh.pop %v1131
  %v1148 = vtanh.pop %v1132
  %v1149 = vtanh.pop %v1133
  %v1150 = vtanh.pop %v1134
  %v1151 = vtanh.pop %v1135
  %v1152 = vtanh.pop %v1136
  %v1153 = vtanh.pop %v1137
  %v1154 = vadd.f32 %v1138, 1.0
  %v1155 = vadd.f32 %v1139, 1.0
  %v1156 = vadd.f32 %v1140, 1.0
  %v1157 = vadd.f32 %v1141, 1.0
  %v1158 = vadd.f32 %v1142, 1.0
  %v1159 = vadd.f32 %v1143, 1.0
  %v1160 = vadd.f32 %v1144, 1.0
  %v1161 = vadd.f32 %v1145, 1.0
  %v1162 = vadd.f32 %v1146, 1.0
  %v1163 = vadd.f32 %v1147, 1.0
  %v1164 = vadd.f32 %v1148, 1.0
  %v1165 = vadd.f32 %v1149, 1.0
  %v1166 = vadd.f32 %v1150, 1.0
  %v1167 = vadd.f32 %v1151, 1.0
  %v1168 = vadd.f32 %v1152, 1.0
  %v1169 = vadd.f32 %v1153, 1.0
  %v1170 = vmul.f32 %v1122, %v1154
  %v1171 = vmul.f32 %v1123, %v1155
  %v1172 = vmul.f32 %v1124, %v1156
  %v1173 = vmul.f32 %v1125, %v1157
  %v1174 = vmul.f32 %v1126, %v1158
  %v1175 = vmul.f32 %v1127, %v1159
  %v1176 = vmul.f32 %v1128, %v1160
  %v1177 = vmul.f32 %v1129, %v1161
  %v1178 = vmul.f32 %v1130, %v1162
  %v1179 = vmul.f32 %v1131, %v1163
  %v1180 = vmul.f32 %v1132, %v1164
  %v1181 = vmul.f32 %v1133, %v1165
  %v1182 = vmul.f32 %v1134, %v1166
  %v1183 = vmul.f32 %v1135, %v1167
  %v1184 = vmul.f32 %v1136, %v1168
  %v1185 = vmul.f32 %v1137, %v1169
  %v1186 = vld [vmem:[%s6] sm:$0xf]
  %v1187 = vpack.c.bf16 %v1171, %v1170
  %v1188 = vpack.c.bf16 %v1173, %v1172
  %v1189 = vpack.c.bf16 %v1175, %v1174
  %v1190 = vpack.c.bf16 %v1177, %v1176
  %v1191 = vpack.c.bf16 %v1179, %v1178
  %v1192 = vpack.c.bf16 %v1181, %v1180
  %v1193 = vpack.c.bf16 %v1183, %v1182
  %v1194 = vpack.c.bf16 %v1185, %v1184
  %v1195 = vld [vmem:[%s7] sm:$0xff]
  %1197 = vset.pattern.permute.xlu0 0
  %1198 = vperm.xlu0 %1197, %v1195
  %v1199 = vpop.permute.xlu0 %1198
  %1201 = vmatprep.subr.bf16.mxu0 0
  %1202 = vmatpush1.bf16.msra.mxu0 %v1187
  %1203 = vmatprep.subr.bf16.mxu0 0
  %1204 = vmatpush1.bf16.msra.mxu0 %v1188
  %1205 = vmatprep.subr.bf16.mxu0 0
  %1206 = vmatpush1.bf16.msra.mxu0 %v1189
  %1207 = vmatprep.subr.bf16.mxu0 0
  %1208 = vmatpush1.bf16.msra.mxu0 %v1190
  %1209 = vmatprep.subr.bf16.mxu0 0
  %1210 = vmatpush1.bf16.msra.mxu0 %v1191
  %1211 = vmatprep.subr.bf16.mxu0 0
  %1212 = vmatpush1.bf16.msra.mxu0 %v1192
  %1213 = vmatprep.subr.bf16.mxu0 0
  %1214 = vmatpush1.bf16.msra.mxu0 %v1193
  %1215 = vmatprep.subr.bf16.mxu0 0
  %1216 = vmatpush1.bf16.msra.mxu0 %v1194
  %1217 = vmatprep.subr.bf16.mxu0 0
  %1218 = vmatpush1.bf16.msra.mxu0 0
  %1219 = vmatprep.subr.bf16.mxu0 0
  %1220 = vmatpush1.bf16.msra.mxu0 0
  %1221 = vmatprep.subr.bf16.mxu0 0
  %1222 = vmatpush1.bf16.msra.mxu0 0
  %1223 = vmatprep.subr.bf16.mxu0 0
  %1224 = vmatpush1.bf16.msra.mxu0 0
  %1225 = vmatprep.subr.bf16.mxu0 0
  %1226 = vmatpush1.bf16.msra.mxu0 0
  %1227 = vmatprep.subr.bf16.mxu0 0
  %1228 = vmatpush1.bf16.msra.mxu0 0
  %1229 = vmatprep.subr.bf16.mxu0 0
  %1230 = vmatpush1.bf16.msra.mxu0 0
  %1231 = vmatprep.subr.bf16.mxu0 0
  %1232 = vmatpush1.bf16.msra.mxu0 0
  %1233 = vmatprep.mubr.bf16.mxu0 0
  %1234 = vmatmul.mubr.bf16.gmra.mrb[0].mxu0 %v1186
  %v1235 = vpop.f32.mrb[0].mxu0
  %v1236 = vadd.f32 %v1199, %v1235
  %v1237 = vpop.f32.mrb[0].mxu0
  %v1238 = vpop.f32.mrb[0].mxu0
  %v1239 = vpop.f32.mrb[0].mxu0
  %1240 = vdwg.mxu0
  %1241 = vst [vmem:[%s8] sm:$0x3] %v1236
  // Predicated region
  $region34: #{_mlp_forward.1} parent=0 // pred_check
    _
  $region35: #{_mlp_forward.1} parent=0 // pred_check_branch
    %1243 = sbr.rel (0) target = $region37
  $region36: #{_mlp_forward.1} parent=0 // pred_region
    _
  $region37: #{_mlp_forward.1} parent=0 // pred_fallthru
    _
  // Predicated region
  $region38: #{_mlp_forward.1} parent=0 // pred_check
    _
  $region39: #{_mlp_forward.1} parent=0 // pred_check_branch
    %1245 = sbr.rel (0) target = $region41
  $region40: #{_mlp_forward.1} parent=0 // pred_region
    _
  $region41: #{_mlp_forward.1} parent=0 // pred_fallthru
    _

</llo_original>
